<compile_context>
chip_gen: v7x
topology: tpu7x:2x2x1
jax: 0.10.0
libtpu: 0.0.40
codegen_flags: <defaults>
</compile_context>

<pallas_src>
import math

import numpy as np
import jax
import jax.numpy as jnp
from jax.experimental import pallas as pl
from jax.experimental.pallas import tpu as pltpu


def _round_up(n, m):
    return ((n + m - 1) // m) * m


# ----------------------------------------------------------------------------
# Mask construction (plain numpy glue; identical semantics to the PyTorch code)
# ----------------------------------------------------------------------------
def _create_block_degree(feature, out_block_feature, num_block, mode="stack"):
    out_feature_all = sum(feature)
    if mode == "stack":
        tmp = []
        for i in range(len(feature)):
            bd = np.repeat(np.arange(1, num_block + 1, dtype=np.int64),
                           out_block_feature[i])
            tmp.append(bd[: feature[i]])
        block_degree = np.concatenate(tmp)
    elif mode == "seq":
        tmp = []
        for i in range(len(feature)):
            block_feature_i = math.ceil(feature[i] / (num_block - 1))
            bd = np.tile(np.arange(1, num_block, dtype=np.int64), block_feature_i)
            tmp.append(bd[: feature[i]])
        block_degree = np.concatenate(tmp)
    else:
        raise ValueError("Invalid create degree mode. Use stack or seq.")
    return block_degree[:out_feature_all]


def _hidden_mask_and_degree(out_feature, out_block_feature, in_block_degree, num_block):
    # is_output=False, rand_mask=False -> 'seq' degrees, mask uses >=
    deg = _create_block_degree(out_feature, out_block_feature, num_block, mode="seq")
    mask = (deg[:, None] >= in_block_degree[None, :]).astype(np.float32)
    return mask, deg


def _output_mask_and_degree(out_feature, out_block_feature, in_block_degree, num_block):
    # is_output=True -> 'stack' degrees, mask uses strict >
    deg = _create_block_degree(out_feature, out_block_feature, num_block, mode="stack")
    mask = (deg[:, None] > in_block_degree[None, :]).astype(np.float32)
    return mask, deg


# ----------------------------------------------------------------------------
# Pallas kernel: whole BlockMADE forward, feature-major (features, batch_tile)
# ----------------------------------------------------------------------------
def blockmade_kernel(xT_ref, w0_ref, w1_ref, w2_ref, w3_ref, bias_ref, outT_ref):
    # Weights are pre-masked (out, in) f32, resident in VMEM across the grid.
    # Biases are packed into one (3*hid + out, 1) column slab.
    hid = w0_ref.shape[0]

    b = bias_ref[...]                       # (3*hid + out, 1)
    b0 = b[0 * hid:1 * hid, :]
    b1 = b[1 * hid:2 * hid, :]
    b2 = b[2 * hid:3 * hid, :]
    b3 = b[3 * hid:, :]

    xT = xT_ref[...]                        # (in_all, TILE_B) — batch on lanes

    # first_layer (no activation)
    h = jnp.dot(w0_ref[...], xT, preferred_element_type=jnp.float32) + b0
    # hidden feed-forward layer 1: masked linear -> relu (dropout p=0 identity)
    h = jnp.maximum(jnp.dot(w1_ref[...], h, preferred_element_type=jnp.float32) + b1, 0.0)
    # hidden feed-forward layer 2: masked linear -> relu
    h = jnp.maximum(jnp.dot(w2_ref[...], h, preferred_element_type=jnp.float32) + b2, 0.0)
    # last_layer (is_output=True mask, no activation)
    outT_ref[...] = jnp.dot(w3_ref[...], h, preferred_element_type=jnp.float32) + b3


def blockmade_forward(x, params, max_tile_b=2048):
    """x: (batch, in_all) f32.  params: 4 tuples (W_masked (out,in), b (out,))."""
    (w0, b0), (w1, b1), (w2, b2), (w3, b3) = params
    batch, in_all = x.shape
    out_all = w3.shape[0]

    # Lane-dense batch tiling: batch lives on the 128-lane axis.
    tile_b = min(max_tile_b, _round_up(max(batch, 1), 128))
    padded = _round_up(batch, tile_b)

    xT = jnp.transpose(x)                               # (in_all, batch)
    if padded != batch:
        xT = jnp.pad(xT, ((0, 0), (0, padded - batch)))

    bias_pack = jnp.concatenate([b0, b1, b2, b3]).reshape(-1, 1)

    const_map = lambda i: (0, 0)                        # weights/bias: VMEM-resident
    grid = (padded // tile_b,)

    outT = pl.pallas_call(
        blockmade_kernel,
        out_shape=jax.ShapeDtypeStruct((out_all, padded), jnp.float32),
        grid_spec=pltpu.PrefetchScalarGridSpec(
            num_scalar_prefetch=0,
            grid=grid,
            in_specs=[
                pl.BlockSpec((in_all, tile_b), lambda i: (0, i)),
                pl.BlockSpec(w0.shape, const_map),
                pl.BlockSpec(w1.shape, const_map),
                pl.BlockSpec(w2.shape, const_map),
                pl.BlockSpec(w3.shape, const_map),
                pl.BlockSpec(bias_pack.shape, const_map),
            ],
            out_specs=pl.BlockSpec((out_all, tile_b), lambda i: (0, i)),
        ),
        compiler_params=pltpu.CompilerParams(
            dimension_semantics=("parallel",)),
    )(xT, w0, w1, w2, w3, bias_pack)

    # Back to the module's (batch, features) convention; drop padding rows.
    return jnp.transpose(outT)[:batch]


# ----------------------------------------------------------------------------
# Parameter setup (deterministic nn.Linear-style init, masks folded in once)
# ----------------------------------------------------------------------------
def build_blockmade_params(key,
                           in_feature=(16,),
                           hidden_feature=(32,),
                           out_feature=(32,),
                           out_block_feature=(8,),
                           block_feature=(4,)):
    in_feature = list(in_feature)
    hidden_feature = list(hidden_feature)
    out_feature = list(out_feature)
    out_block_feature = list(out_block_feature)
    block_feature = list(block_feature)

    num_block = math.ceil(in_feature[0] / block_feature[0])

    in_all = sum(in_feature)
    hid_all = sum(hidden_feature)
    out_all = sum(out_feature)

    # degrees / masks, chained exactly as in BlockMADE.__init__
    in_deg = _create_block_degree(in_feature, block_feature, num_block, mode="stack")
    m0, deg0 = _hidden_mask_and_degree(hidden_feature, out_block_feature, in_deg, num_block)
    m1, deg1 = _hidden_mask_and_degree(hidden_feature, out_block_feature, deg0, num_block)
    m2, deg2 = _hidden_mask_and_degree(hidden_feature, out_block_feature, deg1, num_block)
    m3, _ = _output_mask_and_degree(out_feature, out_block_feature, deg2, num_block)
    masks = [m0, m1, m2, m3]  # each (out, in), PyTorch convention

    dims = [(in_all, hid_all), (hid_all, hid_all), (hid_all, hid_all), (hid_all, out_all)]

    params = []
    for (fan_in, fan_out), mask in zip(dims, masks):
        key, kw, kb = jax.random.split(key, 3)
        bound = 1.0 / math.sqrt(fan_in)
        w = jax.random.uniform(kw, (fan_out, fan_in), jnp.float32, -bound, bound)
        b = jax.random.uniform(kb, (fan_out,), jnp.float32, -bound, bound)
        # Fold the static autoregressive mask into the weight (inference path).
        # NOTE: must be re-folded after any weight update if used for training.
        params.append((w * jnp.asarray(mask), b))
    return params


def blockmade_reference(x, params):
    """Pure-JAX reference matching the PyTorch forward (F.linear semantics)."""
    (w0, b0), (w1, b1), (w2, b2), (w3, b3) = params
    h = x @ w0.T + b0
    h = jnp.maximum(h @ w1.T + b1, 0.0)
    h = jnp.maximum(h @ w2.T + b2, 0.0)
    return h @ w3.T + b3


if __name__ == "__main__":
    key = jax.random.PRNGKey(0)
    key, kx = jax.random.split(key)

    in_feature = [16]
    params = build_blockmade_params(
        key,
        in_feature=in_feature,
        hidden_feature=[32],
        out_feature=[32],
        out_block_feature=[8],
        block_feature=[4],
    )

    # Small-batch run (single 128-row tile after padding).
    batch = 2
    x = jax.random.normal(kx, (batch, sum(in_feature)), jnp.float32)
    out = jax.block_until_ready(blockmade_forward(x, params))
    ref = blockmade_reference(x, params)
    np.testing.assert_allclose(np.asarray(out), np.asarray(ref), rtol=1e-5, atol=1e-5)

    # Multi-tile run exercising the batch grid + padding path (300 rows, tile=128).
    key, kx2 = jax.random.split(key)
    x2 = jax.random.normal(kx2, (300, sum(in_feature)), jnp.float32)
    out2 = jax.block_until_ready(blockmade_forward(x2, params, max_tile_b=128))
    ref2 = blockmade_reference(x2, params)
    np.testing.assert_allclose(np.asarray(out2), np.asarray(ref2), rtol=1e-5, atol=1e-5)

    print("KERNEL_OK")
</pallas_src>

<mosaic_0001>
module attributes {stable_mosaic.version = 11 : i64} {
  func.func @blockmade_kernel(%arg0: i32, %arg1: memref<16x128xf32, #tpu.memory_space<vmem>>, %arg2: memref<32x16xf32, #tpu.memory_space<vmem>>, %arg3: memref<32x32xf32, #tpu.memory_space<vmem>>, %arg4: memref<32x32xf32, #tpu.memory_space<vmem>>, %arg5: memref<32x32xf32, #tpu.memory_space<vmem>>, %arg6: memref<128x1xf32, #tpu.memory_space<vmem>>, %arg7: memref<32x128xf32, #tpu.memory_space<vmem>>) attributes {dimension_semantics = [#tpu.dimension_semantics<parallel>], iteration_bounds = array<i64: 1>, scalar_prefetch = 0 : i64, scratch_operands = 0 : i64, tpu.core_type = #tpu.core_type<tc>, window_params = [{transform_indices = @transform_0, window_bounds = array<i64: 16, 128>}, {pipeline_mode = #tpu.pipeline_mode<synchronous>, transform_indices = @transform_1, window_bounds = array<i64: 32, 16>}, {pipeline_mode = #tpu.pipeline_mode<synchronous>, transform_indices = @transform_2, window_bounds = array<i64: 32, 32>}, {pipeline_mode = #tpu.pipeline_mode<synchronous>, transform_indices = @transform_3, window_bounds = array<i64: 32, 32>}, {pipeline_mode = #tpu.pipeline_mode<synchronous>, transform_indices = @transform_4, window_bounds = array<i64: 32, 32>}, {pipeline_mode = #tpu.pipeline_mode<synchronous>, transform_indices = @transform_5, window_bounds = array<i64: 128, 1>}, {transform_indices = @transform_6, window_bounds = array<i64: 32, 128>}]} {
    %c0 = arith.constant 0 : index
    %c0_0 = arith.constant 0 : index
    %0 = vector.load %arg6[%c0, %c0_0] : memref<128x1xf32, #tpu.memory_space<vmem>>, vector<128x1xf32>
    %1 = vector.extract_strided_slice %0 {offsets = [0, 0], sizes = [32, 1], strides = [1, 1]} : vector<128x1xf32> to vector<32x1xf32>
    %2 = vector.extract_strided_slice %0 {offsets = [32, 0], sizes = [32, 1], strides = [1, 1]} : vector<128x1xf32> to vector<32x1xf32>
    %3 = vector.extract_strided_slice %0 {offsets = [64, 0], sizes = [32, 1], strides = [1, 1]} : vector<128x1xf32> to vector<32x1xf32>
    %4 = vector.extract_strided_slice %0 {offsets = [96, 0], sizes = [32, 1], strides = [1, 1]} : vector<128x1xf32> to vector<32x1xf32>
    %c0_1 = arith.constant 0 : index
    %c0_2 = arith.constant 0 : index
    %5 = vector.load %arg1[%c0_1, %c0_2] : memref<16x128xf32, #tpu.memory_space<vmem>>, vector<16x128xf32>
    %c0_3 = arith.constant 0 : index
    %c0_4 = arith.constant 0 : index
    %6 = vector.load %arg2[%c0_3, %c0_4] : memref<32x16xf32, #tpu.memory_space<vmem>>, vector<32x16xf32>
    %cst = arith.constant dense<0.000000e+00> : vector<32x128xf32>
    %7 = tpu.matmul %6, %5, %cst {dimension_numbers = #tpu.dot_dimension_numbers<[1], [0], [0], [1], [0, 0, 1, 1], [], []>} : vector<32x16xf32>, vector<16x128xf32>, vector<32x128xf32> -> vector<32x128xf32>
    %8 = vector.broadcast %1 : vector<32x1xf32> to vector<32x128xf32>
    %9 = arith.addf %7, %8 : vector<32x128xf32>
    %c0_5 = arith.constant 0 : index
    %c0_6 = arith.constant 0 : index
    %10 = vector.load %arg3[%c0_5, %c0_6] : memref<32x32xf32, #tpu.memory_space<vmem>>, vector<32x32xf32>
    %cst_7 = arith.constant dense<0.000000e+00> : vector<32x128xf32>
    %11 = tpu.matmul %10, %9, %cst_7 {dimension_numbers = #tpu.dot_dimension_numbers<[1], [0], [0], [1], [0, 0, 1, 1], [], []>} : vector<32x32xf32>, vector<32x128xf32>, vector<32x128xf32> -> vector<32x128xf32>
    %12 = vector.broadcast %2 : vector<32x1xf32> to vector<32x128xf32>
    %13 = arith.addf %11, %12 : vector<32x128xf32>
    %cst_8 = arith.constant 0.000000e+00 : f32
    %14 = vector.broadcast %cst_8 : f32 to vector<32x128xf32>
    %15 = arith.maximumf %13, %14 : vector<32x128xf32>
    %c0_9 = arith.constant 0 : index
    %c0_10 = arith.constant 0 : index
    %16 = vector.load %arg4[%c0_9, %c0_10] : memref<32x32xf32, #tpu.memory_space<vmem>>, vector<32x32xf32>
    %cst_11 = arith.constant dense<0.000000e+00> : vector<32x128xf32>
    %17 = tpu.matmul %16, %15, %cst_11 {dimension_numbers = #tpu.dot_dimension_numbers<[1], [0], [0], [1], [0, 0, 1, 1], [], []>} : vector<32x32xf32>, vector<32x128xf32>, vector<32x128xf32> -> vector<32x128xf32>
    %18 = vector.broadcast %3 : vector<32x1xf32> to vector<32x128xf32>
    %19 = arith.addf %17, %18 : vector<32x128xf32>
    %cst_12 = arith.constant 0.000000e+00 : f32
    %20 = vector.broadcast %cst_12 : f32 to vector<32x128xf32>
    %21 = arith.maximumf %19, %20 : vector<32x128xf32>
    %c0_13 = arith.constant 0 : index
    %c0_14 = arith.constant 0 : index
    %22 = vector.load %arg5[%c0_13, %c0_14] : memref<32x32xf32, #tpu.memory_space<vmem>>, vector<32x32xf32>
    %cst_15 = arith.constant dense<0.000000e+00> : vector<32x128xf32>
    %23 = tpu.matmul %22, %21, %cst_15 {dimension_numbers = #tpu.dot_dimension_numbers<[1], [0], [0], [1], [0, 0, 1, 1], [], []>} : vector<32x32xf32>, vector<32x128xf32>, vector<32x128xf32> -> vector<32x128xf32>
    %24 = vector.broadcast %4 : vector<32x1xf32> to vector<32x128xf32>
    %25 = arith.addf %23, %24 : vector<32x128xf32>
    %c0_16 = arith.constant 0 : index
    %c0_17 = arith.constant 0 : index
    %26 = vector.load %arg7[%c0_16, %c0_17] : memref<32x128xf32, #tpu.memory_space<vmem>>, vector<32x128xf32>
    tpu.vector_store %arg7[%c0_16, %c0_17], %25 {strides = array<i32>} : memref<32x128xf32, #tpu.memory_space<vmem>>, vector<32x128xf32>,
    return
  }
  func.func @transform_0(%arg0: i32) -> (i32, i32) {
    %c0_i32 = arith.constant 0 : i32
    %c0_i32_0 = arith.constant 0 : i32
    return %c0_i32, %arg0 : i32, i32
  }
  func.func @transform_1(%arg0: i32) -> (i32, i32) {
    %c0_i32 = arith.constant 0 : i32
    %c0_i32_0 = arith.constant 0 : i32
    %c0_i32_1 = arith.constant 0 : i32
    return %c0_i32, %c0_i32_0 : i32, i32
  }
  func.func @transform_2(%arg0: i32) -> (i32, i32) {
    %c0_i32 = arith.constant 0 : i32
    %c0_i32_0 = arith.constant 0 : i32
    %c0_i32_1 = arith.constant 0 : i32
    return %c0_i32, %c0_i32_0 : i32, i32
  }
  func.func @transform_3(%arg0: i32) -> (i32, i32) {
    %c0_i32 = arith.constant 0 : i32
    %c0_i32_0 = arith.constant 0 : i32
    %c0_i32_1 = arith.constant 0 : i32
    return %c0_i32, %c0_i32_0 : i32, i32
  }
  func.func @transform_4(%arg0: i32) -> (i32, i32) {
    %c0_i32 = arith.constant 0 : i32
    %c0_i32_0 = arith.constant 0 : i32
    %c0_i32_1 = arith.constant 0 : i32
    return %c0_i32, %c0_i32_0 : i32, i32
  }
  func.func @transform_5(%arg0: i32) -> (i32, i32) {
    %c0_i32 = arith.constant 0 : i32
    %c0_i32_0 = arith.constant 0 : i32
    %c0_i32_1 = arith.constant 0 : i32
    return %c0_i32, %c0_i32_0 : i32, i32
  }
  func.func @transform_6(%arg0: i32) -> (i32, i32) {
    %c0_i32 = arith.constant 0 : i32
    %c0_i32_0 = arith.constant 0 : i32
    return %c0_i32, %arg0 : i32, i32
  }
}

</mosaic_0001>

<llo_original>
// kernel: tpu_custom_call.1
$region0: #{tpu_custom_call.1}
  #allocation0 [shape = 'u32[]', space=smem, size = 0x4, offset = 0x4, fixed_abs, tag = 'smem constant byte address 0x4 - core index']
  #allocation1 [shape = 'u32[144,128]{1,0:T(1,128)}', space=vmem, size = 0x12000, scoped, tag = 'internal scratch']
  %s0 = inlined_call_operand.vmem [shape: f32[16,128], index: 0, kind: input, shape index: {}]
  %s1 = inlined_call_operand.vmem [shape: f32[32,16], index: 1, kind: input, shape index: {}]
  %s2 = inlined_call_operand.vmem [shape: f32[32,32], index: 2, kind: input, shape index: {}]
  %s3 = inlined_call_operand.vmem [shape: f32[32,32], index: 3, kind: input, shape index: {}]
  %s4 = inlined_call_operand.vmem [shape: f32[32,32], index: 4, kind: input, shape index: {}]
  %s5 = inlined_call_operand.vmem [shape: f32[128,1], index: 5, kind: input, shape index: {}]
  %s6 = inlined_call_operand.hbm [shape: f32[32,128], index: 6, kind: output, shape index: {}]
  %s7 = sld [smem:[#allocation0]]
  $region34: #{tpu_custom_call.1} parent=0
    _
  %s9 = ssub.s32 1, %s7
  %s10 = scalar_select 0, %s9, %s7
  $region1: #{tpu_custom_call.1} parent=0
    #allocation2 [shape = 'u8[16384]{0}', space=vmem, size = 0x4000, scoped, tag = 'output window, operand 0, single buffered']
    #allocation3 [shape = 's32[1]{0}', space=sflag, size = 0x4, scoped, tag = 'scoped memory for tpu_custom_call.1']
    %11 = vsyncpa [#allocation3], 0
    // Predicated region
    $region2: #{tpu_custom_call.1} parent=1 // pred_check
      _
    $region3: #{tpu_custom_call.1} parent=1 // pred_check_branch
      %13 = sbr.rel (0) target = $region5
    $region4: #{tpu_custom_call.1} parent=1 // pred_region
      _
    $region5: #{tpu_custom_call.1} parent=1 // pred_fallthru
      _
    // Predicated region
    $region6: #{tpu_custom_call.1} parent=1 // pred_check
      _
    $region7: #{tpu_custom_call.1} parent=1 // pred_check_branch
      %15 = sbr.rel (0) target = $region9
    $region8: #{tpu_custom_call.1} parent=1 // pred_region
      _
    $region9: #{tpu_custom_call.1} parent=1 // pred_fallthru
      _
    // Predicated region
    $region10: #{tpu_custom_call.1} parent=1 // pred_check
      _
    $region11: #{tpu_custom_call.1} parent=1 // pred_check_branch
      %17 = sbr.rel (0) target = $region13
    $region12: #{tpu_custom_call.1} parent=1 // pred_region
      _
    $region13: #{tpu_custom_call.1} parent=1 // pred_fallthru
      _
    // Predicated region
    $region14: #{tpu_custom_call.1} parent=1 // pred_check
      _
    $region15: #{tpu_custom_call.1} parent=1 // pred_check_branch
      %19 = sbr.rel (0) target = $region17
    $region16: #{tpu_custom_call.1} parent=1 // pred_region
      _
    $region17: #{tpu_custom_call.1} parent=1 // pred_fallthru
      _
    // Predicated region
    $region18: #{tpu_custom_call.1} parent=1 // pred_check
      _
    $region19: #{tpu_custom_call.1} parent=1 // pred_check_branch
      %21 = sbr.rel (0) target = $region21
    $region20: #{tpu_custom_call.1} parent=1 // pred_region
      _
    $region21: #{tpu_custom_call.1} parent=1 // pred_fallthru
      _
    // Predicated region
    $region22: #{tpu_custom_call.1} parent=1 // pred_check
      _
    $region23: #{tpu_custom_call.1} parent=1 // pred_check_branch
      %23 = sbr.rel (0) target = $region25
    $region24: #{tpu_custom_call.1} parent=1 // pred_region
      _
    $region25: #{tpu_custom_call.1} parent=1 // pred_fallthru
      _
    %v24 = vld [vmem:[%s5] sm:$0xff]
    %v25 = vld [vmem:[%s5 + $0x8] sm:$0xff]
    %v26 = vld [vmem:[%s5 + $0x10] sm:$0xff]
    %v27 = vld [vmem:[%s5 + $0x18] sm:$0xff]
    %v28 = vld [vmem:[%s5 + $0x20] sm:$0xff]
    %v29 = vld [vmem:[%s5 + $0x28] sm:$0xff]
    %v30 = vld [vmem:[%s5 + $0x30] sm:$0xff]
    %v31 = vld [vmem:[%s5 + $0x38] sm:$0xff]
    %v32 = vld [vmem:[%s5 + $0x40] sm:$0xff]
    %v33 = vld [vmem:[%s5 + $0x48] sm:$0xff]
    %v34 = vld [vmem:[%s5 + $0x50] sm:$0xff]
    %v35 = vld [vmem:[%s5 + $0x58] sm:$0xff]
    %v36 = vld [vmem:[%s5 + $0x60] sm:$0xff]
    %v37 = vld [vmem:[%s5 + $0x68] sm:$0xff]
    %v38 = vld [vmem:[%s5 + $0x70] sm:$0xff]
    %v39 = vld [vmem:[%s5 + $0x78] sm:$0xff]
    %v40 = vld [vmem:[%s0] sm:$0xff]
    %v41 = vld [vmem:[%s0 + $0x8] sm:$0xff]
    %v42 = vld [vmem:[%s1] sm:$0xff]
    %v43 = vld [vmem:[%s1 + $0x8] sm:$0xff]
    %v44 = vld [vmem:[%s1 + $0x10] sm:$0xff]
    %v45 = vld [vmem:[%s1 + $0x18] sm:$0xff]
    %47 = vset.pattern.permute.xlu0 0
    %48 = vperm.xlu0 %47, %v24
    %v49 = vpop.permute.xlu0 %48
    %52 = vset.pattern.permute.xlu0 0
    %53 = vperm.xlu0 %52, %v25
    %v54 = vpop.permute.xlu0 %53
    %57 = vset.pattern.permute.xlu0 0
    %58 = vperm.xlu0 %57, %v26
    %v59 = vpop.permute.xlu0 %58
    %62 = vset.pattern.permute.xlu0 0
    %63 = vperm.xlu0 %62, %v27
    %v64 = vpop.permute.xlu0 %63
    %vm66 = vcmask 130048
    %v68 = vsel %vm66, %v42, 0
    %v71 = vsel %vm66, %v43, 0
    %v74 = vsel %vm66, %v44, 0
    %v77 = vsel %vm66, %v45, 0
    %79 = vmatprep.subr.mxu0 0.0
    %80 = vmatpush1.msra.mxu0 %v40
    %81 = vmatprep.subr.mxu0 0.0
    %82 = vmatpush1.msra.mxu0 %v41
    %83 = vmatprep.subr.mxu0 0.0
    %84 = vmatpush1.msra.mxu0 0.0
    %85 = vmatprep.subr.mxu0 0.0
    %86 = vmatpush1.msra.mxu0 0.0
    %87 = vmatprep.subr.mxu0 0.0
    %88 = vmatpush1.msra.mxu0 0.0
    %89 = vmatprep.subr.mxu0 0.0
    %90 = vmatpush1.msra.mxu0 0.0
    %91 = vmatprep.subr.mxu0 0.0
    %92 = vmatpush1.msra.mxu0 0.0
    %93 = vmatprep.subr.mxu0 0.0
    %94 = vmatpush1.msra.mxu0 0.0
    %95 = vmatprep.subr.mxu0 0.0
    %96 = vmatpush1.msra.mxu0 0.0
    %97 = vmatprep.subr.mxu0 0.0
    %98 = vmatpush1.msra.mxu0 0.0
    %99 = vmatprep.subr.mxu0 0.0
    %100 = vmatpush1.msra.mxu0 0.0
    %101 = vmatprep.subr.mxu0 0.0
    %102 = vmatpush1.msra.mxu0 0.0
    %103 = vmatprep.subr.mxu0 0.0
    %104 = vmatpush1.msra.mxu0 0.0
    %105 = vmatprep.subr.mxu0 0.0
    %106 = vmatpush1.msra.mxu0 0.0
    %107 = vmatprep.subr.mxu0 0.0
    %108 = vmatpush1.msra.mxu0 0.0
    %109 = vmatprep.subr.mxu0 0.0
    %110 = vmatpush1.msra.mxu0 0.0
    %111 = vmatprep.subr.mxu0 0.0
    %112 = vmatpush1.msra.mxu0 0.0
    %113 = vmatprep.subr.mxu0 0.0
    %114 = vmatpush1.msra.mxu0 0.0
    %115 = vmatprep.subr.mxu0 0.0
    %116 = vmatpush1.msra.mxu0 0.0
    %117 = vmatprep.subr.mxu0 0.0
    %118 = vmatpush1.msra.mxu0 0.0
    %119 = vmatprep.subr.mxu0 0.0
    %120 = vmatpush1.msra.mxu0 0.0
    %121 = vmatprep.subr.mxu0 0.0
    %122 = vmatpush1.msra.mxu0 0.0
    %123 = vmatprep.subr.mxu0 0.0
    %124 = vmatpush1.msra.mxu0 0.0
    %125 = vmatprep.subr.mxu0 0.0
    %126 = vmatpush1.msra.mxu0 0.0
    %127 = vmatprep.subr.mxu0 0.0
    %128 = vmatpush1.msra.mxu0 0.0
    %129 = vmatprep.subr.mxu0 0.0
    %130 = vmatpush1.msra.mxu0 0.0
    %131 = vmatprep.subr.mxu0 0.0
    %132 = vmatpush1.msra.mxu0 0.0
    %133 = vmatprep.subr.mxu0 0.0
    %134 = vmatpush1.msra.mxu0 0.0
    %135 = vmatprep.subr.mxu0 0.0
    %136 = vmatpush1.msra.mxu0 0.0
    %137 = vmatprep.subr.mxu0 0.0
    %138 = vmatpush1.msra.mxu0 0.0
    %139 = vmatprep.subr.mxu0 0.0
    %140 = vmatpush1.msra.mxu0 0.0
    %141 = vmatprep.subr.mxu0 0.0
    %142 = vmatpush1.msra.mxu0 0.0
    %143 = vmatprep.mubr.f32.mxu0 0.0
    %144 = vmatmul.mubr.f32.gmra.mrb[0].mxu0 %v68
    %v145 = vpop.f32.mrb[0].mxu0
    %v146 = vadd.f32 %v49, %v145
    %v147 = vpop.f32.mrb[0].mxu0
    %148 = vmatprep.mubr.f32.mxu0 0.0
    %149 = vmatmul.mubr.f32.gmra.mrb[0].mxu0 %v71
    %v150 = vpop.f32.mrb[0].mxu0
    %v151 = vadd.f32 %v54, %v150
    %v152 = vpop.f32.mrb[0].mxu0
    %153 = vmatprep.mubr.f32.mxu0 0.0
    %154 = vmatmul.mubr.f32.gmra.mrb[0].mxu0 %v74
    %v155 = vpop.f32.mrb[0].mxu0
    %v156 = vadd.f32 %v59, %v155
    %v157 = vpop.f32.mrb[0].mxu0
    %158 = vmatprep.mubr.f32.mxu0 0.0
    %159 = vmatmul.mubr.f32.gmra.mrb[0].mxu0 %v77
    %v160 = vpop.f32.mrb[0].mxu0
    %v161 = vadd.f32 %v64, %v160
    %v162 = vpop.f32.mrb[0].mxu0
    %163 = vdwg.mxu0
    %v164 = vld [vmem:[%s2] sm:$0xff]
    %v165 = vld [vmem:[%s2 + $0x8] sm:$0xff]
    %v166 = vld [vmem:[%s2 + $0x10] sm:$0xff]
    %v167 = vld [vmem:[%s2 + $0x18] sm:$0xff]
    %169 = vset.pattern.permute.xlu0 0
    %170 = vperm.xlu0 %169, %v28
    %v171 = vpop.permute.xlu0 %170
    %174 = vset.pattern.permute.xlu0 0
    %175 = vperm.xlu0 %174, %v29
    %v176 = vpop.permute.xlu0 %175
    %179 = vset.pattern.permute.xlu0 0
    %180 = vperm.xlu0 %179, %v30
    %v181 = vpop.permute.xlu0 %180
    %184 = vset.pattern.permute.xlu0 0
    %185 = vperm.xlu0 %184, %v31
    %v186 = vpop.permute.xlu0 %185
    %vm188 = vcmask 261120
    %v190 = vsel %vm188, %v164, 0
    %v193 = vsel %vm188, %v165, 0
    %v196 = vsel %vm188, %v166, 0
    %v199 = vsel %vm188, %v167, 0
    %201 = vmatprep.subr.mxu0 0.0
    %202 = vmatpush1.msra.mxu0 %v146
    %203 = vmatprep.subr.mxu0 0.0
    %204 = vmatpush1.msra.mxu0 %v151
    %205 = vmatprep.subr.mxu0 0.0
    %206 = vmatpush1.msra.mxu0 %v156
    %207 = vmatprep.subr.mxu0 0.0
    %208 = vmatpush1.msra.mxu0 %v161
    %209 = vmatprep.subr.mxu0 0.0
    %210 = vmatpush1.msra.mxu0 0.0
    %211 = vmatprep.subr.mxu0 0.0
    %212 = vmatpush1.msra.mxu0 0.0
    %213 = vmatprep.subr.mxu0 0.0
    %214 = vmatpush1.msra.mxu0 0.0
    %215 = vmatprep.subr.mxu0 0.0
    %216 = vmatpush1.msra.mxu0 0.0
    %217 = vmatprep.subr.mxu0 0.0
    %218 = vmatpush1.msra.mxu0 0.0
    %219 = vmatprep.subr.mxu0 0.0
    %220 = vmatpush1.msra.mxu0 0.0
    %221 = vmatprep.subr.mxu0 0.0
    %222 = vmatpush1.msra.mxu0 0.0
    %223 = vmatprep.subr.mxu0 0.0
    %224 = vmatpush1.msra.mxu0 0.0
    %225 = vmatprep.subr.mxu0 0.0
    %226 = vmatpush1.msra.mxu0 0.0
    %227 = vmatprep.subr.mxu0 0.0
    %228 = vmatpush1.msra.mxu0 0.0
    %229 = vmatprep.subr.mxu0 0.0
    %230 = vmatpush1.msra.mxu0 0.0
    %231 = vmatprep.subr.mxu0 0.0
    %232 = vmatpush1.msra.mxu0 0.0
    %233 = vmatprep.subr.mxu0 0.0
    %234 = vmatpush1.msra.mxu0 0.0
    %235 = vmatprep.subr.mxu0 0.0
    %236 = vmatpush1.msra.mxu0 0.0
    %237 = vmatprep.subr.mxu0 0.0
    %238 = vmatpush1.msra.mxu0 0.0
    %239 = vmatprep.subr.mxu0 0.0
    %240 = vmatpush1.msra.mxu0 0.0
    %241 = vmatprep.subr.mxu0 0.0
    %242 = vmatpush1.msra.mxu0 0.0
    %243 = vmatprep.subr.mxu0 0.0
    %244 = vmatpush1.msra.mxu0 0.0
    %245 = vmatprep.subr.mxu0 0.0
    %246 = vmatpush1.msra.mxu0 0.0
    %247 = vmatprep.subr.mxu0 0.0
    %248 = vmatpush1.msra.mxu0 0.0
    %249 = vmatprep.subr.mxu0 0.0
    %250 = vmatpush1.msra.mxu0 0.0
    %251 = vmatprep.subr.mxu0 0.0
    %252 = vmatpush1.msra.mxu0 0.0
    %253 = vmatprep.subr.mxu0 0.0
    %254 = vmatpush1.msra.mxu0 0.0
    %255 = vmatprep.subr.mxu0 0.0
    %256 = vmatpush1.msra.mxu0 0.0
    %257 = vmatprep.subr.mxu0 0.0
    %258 = vmatpush1.msra.mxu0 0.0
    %259 = vmatprep.subr.mxu0 0.0
    %260 = vmatpush1.msra.mxu0 0.0
    %261 = vmatprep.subr.mxu0 0.0
    %262 = vmatpush1.msra.mxu0 0.0
    %263 = vmatprep.subr.mxu0 0.0
    %264 = vmatpush1.msra.mxu0 0.0
    %265 = vmatprep.mubr.f32.mxu0 0.0
    %266 = vmatmul.mubr.f32.gmra.mrb[0].mxu0 %v190
    %v267 = vpop.f32.mrb[0].mxu0
    %v268 = vadd.f32 %v171, %v267
    %v269 = vpop.f32.mrb[0].mxu0
    %270 = vmatprep.mubr.f32.mxu0 0.0
    %271 = vmatmul.mubr.f32.gmra.mrb[0].mxu0 %v193
    %v272 = vpop.f32.mrb[0].mxu0
    %v273 = vadd.f32 %v176, %v272
    %v274 = vpop.f32.mrb[0].mxu0
    %275 = vmatprep.mubr.f32.mxu0 0.0
    %276 = vmatmul.mubr.f32.gmra.mrb[0].mxu0 %v196
    %v277 = vpop.f32.mrb[0].mxu0
    %v278 = vadd.f32 %v181, %v277
    %v279 = vpop.f32.mrb[0].mxu0
    %280 = vmatprep.mubr.f32.mxu0 0.0
    %281 = vmatmul.mubr.f32.gmra.mrb[0].mxu0 %v199
    %v282 = vpop.f32.mrb[0].mxu0
    %v283 = vadd.f32 %v186, %v282
    %v284 = vpop.f32.mrb[0].mxu0
    %285 = vdwg.mxu0
    %v286 = vmax.f32 %v268, 0.0
    %v287 = vmax.f32 %v273, 0.0
    %v288 = vmax.f32 %v278, 0.0
    %v289 = vmax.f32 %v283, 0.0
    %v290 = vld [vmem:[%s3] sm:$0xff]
    %v291 = vld [vmem:[%s3 + $0x8] sm:$0xff]
    %v292 = vld [vmem:[%s3 + $0x10] sm:$0xff]
    %v293 = vld [vmem:[%s3 + $0x18] sm:$0xff]
    %295 = vset.pattern.permute.xlu0 0
    %296 = vperm.xlu0 %295, %v32
    %v297 = vpop.permute.xlu0 %296
    %300 = vset.pattern.permute.xlu0 0
    %301 = vperm.xlu0 %300, %v33
    %v302 = vpop.permute.xlu0 %301
    %305 = vset.pattern.permute.xlu0 0
    %306 = vperm.xlu0 %305, %v34
    %v307 = vpop.permute.xlu0 %306
    %310 = vset.pattern.permute.xlu0 0
    %311 = vperm.xlu0 %310, %v35
    %v312 = vpop.permute.xlu0 %311
    %v315 = vsel %vm188, %v290, 0
    %v318 = vsel %vm188, %v291, 0
    %v321 = vsel %vm188, %v292, 0
    %v324 = vsel %vm188, %v293, 0
    %326 = vmatprep.subr.mxu0 0.0
    %327 = vmatpush1.msra.mxu0 %v286
    %328 = vmatprep.subr.mxu0 0.0
    %329 = vmatpush1.msra.mxu0 %v287
    %330 = vmatprep.subr.mxu0 0.0
    %331 = vmatpush1.msra.mxu0 %v288
    %332 = vmatprep.subr.mxu0 0.0
    %333 = vmatpush1.msra.mxu0 %v289
    %334 = vmatprep.subr.mxu0 0.0
    %335 = vmatpush1.msra.mxu0 0.0
    %336 = vmatprep.subr.mxu0 0.0
    %337 = vmatpush1.msra.mxu0 0.0
    %338 = vmatprep.subr.mxu0 0.0
    %339 = vmatpush1.msra.mxu0 0.0
    %340 = vmatprep.subr.mxu0 0.0
    %341 = vmatpush1.msra.mxu0 0.0
    %342 = vmatprep.subr.mxu0 0.0
    %343 = vmatpush1.msra.mxu0 0.0
    %344 = vmatprep.subr.mxu0 0.0
    %345 = vmatpush1.msra.mxu0 0.0
    %346 = vmatprep.subr.mxu0 0.0
    %347 = vmatpush1.msra.mxu0 0.0
    %348 = vmatprep.subr.mxu0 0.0
    %349 = vmatpush1.msra.mxu0 0.0
    %350 = vmatprep.subr.mxu0 0.0
    %351 = vmatpush1.msra.mxu0 0.0
    %352 = vmatprep.subr.mxu0 0.0
    %353 = vmatpush1.msra.mxu0 0.0
    %354 = vmatprep.subr.mxu0 0.0
    %355 = vmatpush1.msra.mxu0 0.0
    %356 = vmatprep.subr.mxu0 0.0
    %357 = vmatpush1.msra.mxu0 0.0
    %358 = vmatprep.subr.mxu0 0.0
    %359 = vmatpush1.msra.mxu0 0.0
    %360 = vmatprep.subr.mxu0 0.0
    %361 = vmatpush1.msra.mxu0 0.0
    %362 = vmatprep.subr.mxu0 0.0
    %363 = vmatpush1.msra.mxu0 0.0
    %364 = vmatprep.subr.mxu0 0.0
    %365 = vmatpush1.msra.mxu0 0.0
    %366 = vmatprep.subr.mxu0 0.0
    %367 = vmatpush1.msra.mxu0 0.0
    %368 = vmatprep.subr.mxu0 0.0
    %369 = vmatpush1.msra.mxu0 0.0
    %370 = vmatprep.subr.mxu0 0.0
    %371 = vmatpush1.msra.mxu0 0.0
    %372 = vmatprep.subr.mxu0 0.0
    %373 = vmatpush1.msra.mxu0 0.0
    %374 = vmatprep.subr.mxu0 0.0
    %375 = vmatpush1.msra.mxu0 0.0
    %376 = vmatprep.subr.mxu0 0.0
    %377 = vmatpush1.msra.mxu0 0.0
    %378 = vmatprep.subr.mxu0 0.0
    %379 = vmatpush1.msra.mxu0 0.0
    %380 = vmatprep.subr.mxu0 0.0
    %381 = vmatpush1.msra.mxu0 0.0
    %382 = vmatprep.subr.mxu0 0.0
    %383 = vmatpush1.msra.mxu0 0.0
    %384 = vmatprep.subr.mxu0 0.0
    %385 = vmatpush1.msra.mxu0 0.0
    %386 = vmatprep.subr.mxu0 0.0
    %387 = vmatpush1.msra.mxu0 0.0
    %388 = vmatprep.subr.mxu0 0.0
    %389 = vmatpush1.msra.mxu0 0.0
    %390 = vmatprep.mubr.f32.mxu0 0.0
    %391 = vmatmul.mubr.f32.gmra.mrb[0].mxu0 %v315
    %v392 = vpop.f32.mrb[0].mxu0
    %v393 = vadd.f32 %v297, %v392
    %v394 = vpop.f32.mrb[0].mxu0
    %395 = vmatprep.mubr.f32.mxu0 0.0
    %396 = vmatmul.mubr.f32.gmra.mrb[0].mxu0 %v318
    %v397 = vpop.f32.mrb[0].mxu0
    %v398 = vadd.f32 %v302, %v397
    %v399 = vpop.f32.mrb[0].mxu0
    %400 = vmatprep.mubr.f32.mxu0 0.0
    %401 = vmatmul.mubr.f32.gmra.mrb[0].mxu0 %v321
    %v402 = vpop.f32.mrb[0].mxu0
    %v403 = vadd.f32 %v307, %v402
    %v404 = vpop.f32.mrb[0].mxu0
    %405 = vmatprep.mubr.f32.mxu0 0.0
    %406 = vmatmul.mubr.f32.gmra.mrb[0].mxu0 %v324
    %v407 = vpop.f32.mrb[0].mxu0
    %v408 = vadd.f32 %v312, %v407
    %v409 = vpop.f32.mrb[0].mxu0
    %410 = vdwg.mxu0
    %v411 = vmax.f32 %v393, 0.0
    %v412 = vmax.f32 %v398, 0.0
    %v413 = vmax.f32 %v403, 0.0
    %v414 = vmax.f32 %v408, 0.0
    %v415 = vld [vmem:[%s4] sm:$0xff]
    %v416 = vld [vmem:[%s4 + $0x8] sm:$0xff]
    %v417 = vld [vmem:[%s4 + $0x10] sm:$0xff]
    %v418 = vld [vmem:[%s4 + $0x18] sm:$0xff]
    %420 = vset.pattern.permute.xlu0 0
    %421 = vperm.xlu0 %420, %v36
    %v422 = vpop.permute.xlu0 %421
    %425 = vset.pattern.permute.xlu0 0
    %426 = vperm.xlu0 %425, %v37
    %v427 = vpop.permute.xlu0 %426
    %430 = vset.pattern.permute.xlu0 0
    %431 = vperm.xlu0 %430, %v38
    %v432 = vpop.permute.xlu0 %431
    %435 = vset.pattern.permute.xlu0 0
    %436 = vperm.xlu0 %435, %v39
    %v437 = vpop.permute.xlu0 %436
    %v440 = vsel %vm188, %v415, 0
    %v443 = vsel %vm188, %v416, 0
    %v446 = vsel %vm188, %v417, 0
    %v449 = vsel %vm188, %v418, 0
    %451 = vmatprep.subr.mxu0 0.0
    %452 = vmatpush1.msra.mxu0 %v411
    %453 = vmatprep.subr.mxu0 0.0
    %454 = vmatpush1.msra.mxu0 %v412
    %455 = vmatprep.subr.mxu0 0.0
    %456 = vmatpush1.msra.mxu0 %v413
    %457 = vmatprep.subr.mxu0 0.0
    %458 = vmatpush1.msra.mxu0 %v414
    %459 = vmatprep.subr.mxu0 0.0
    %460 = vmatpush1.msra.mxu0 0.0
    %461 = vmatprep.subr.mxu0 0.0
    %462 = vmatpush1.msra.mxu0 0.0
    %463 = vmatprep.subr.mxu0 0.0
    %464 = vmatpush1.msra.mxu0 0.0
    %465 = vmatprep.subr.mxu0 0.0
    %466 = vmatpush1.msra.mxu0 0.0
    %467 = vmatprep.subr.mxu0 0.0
    %468 = vmatpush1.msra.mxu0 0.0
    %469 = vmatprep.subr.mxu0 0.0
    %470 = vmatpush1.msra.mxu0 0.0
    %471 = vmatprep.subr.mxu0 0.0
    %472 = vmatpush1.msra.mxu0 0.0
    %473 = vmatprep.subr.mxu0 0.0
    %474 = vmatpush1.msra.mxu0 0.0
    %475 = vmatprep.subr.mxu0 0.0
    %476 = vmatpush1.msra.mxu0 0.0
    %477 = vmatprep.subr.mxu0 0.0
    %478 = vmatpush1.msra.mxu0 0.0
    %479 = vmatprep.subr.mxu0 0.0
    %480 = vmatpush1.msra.mxu0 0.0
    %481 = vmatprep.subr.mxu0 0.0
    %482 = vmatpush1.msra.mxu0 0.0
    %483 = vmatprep.subr.mxu0 0.0
    %484 = vmatpush1.msra.mxu0 0.0
    %485 = vmatprep.subr.mxu0 0.0
    %486 = vmatpush1.msra.mxu0 0.0
    %487 = vmatprep.subr.mxu0 0.0
    %488 = vmatpush1.msra.mxu0 0.0
    %489 = vmatprep.subr.mxu0 0.0
    %490 = vmatpush1.msra.mxu0 0.0
    %491 = vmatprep.subr.mxu0 0.0
    %492 = vmatpush1.msra.mxu0 0.0
    %493 = vmatprep.subr.mxu0 0.0
    %494 = vmatpush1.msra.mxu0 0.0
    %495 = vmatprep.subr.mxu0 0.0
    %496 = vmatpush1.msra.mxu0 0.0
    %497 = vmatprep.subr.mxu0 0.0
    %498 = vmatpush1.msra.mxu0 0.0
    %499 = vmatprep.subr.mxu0 0.0
    %500 = vmatpush1.msra.mxu0 0.0
    %501 = vmatprep.subr.mxu0 0.0
    %502 = vmatpush1.msra.mxu0 0.0
    %503 = vmatprep.subr.mxu0 0.0
    %504 = vmatpush1.msra.mxu0 0.0
    %505 = vmatprep.subr.mxu0 0.0
    %506 = vmatpush1.msra.mxu0 0.0
    %507 = vmatprep.subr.mxu0 0.0
    %508 = vmatpush1.msra.mxu0 0.0
    %509 = vmatprep.subr.mxu0 0.0
    %510 = vmatpush1.msra.mxu0 0.0
    %511 = vmatprep.subr.mxu0 0.0
    %512 = vmatpush1.msra.mxu0 0.0
    %513 = vmatprep.subr.mxu0 0.0
    %514 = vmatpush1.msra.mxu0 0.0
    %515 = vmatprep.mubr.f32.mxu0 0.0
    %516 = vmatmul.mubr.f32.gmra.mrb[0].mxu0 %v440
    %v517 = vpop.f32.mrb[0].mxu0
    %v518 = vadd.f32 %v422, %v517
    %v519 = vpop.f32.mrb[0].mxu0
    %520 = vmatprep.mubr.f32.mxu0 0.0
    %521 = vmatmul.mubr.f32.gmra.mrb[0].mxu0 %v443
    %v522 = vpop.f32.mrb[0].mxu0
    %v523 = vadd.f32 %v427, %v522
    %v524 = vpop.f32.mrb[0].mxu0
    %525 = vmatprep.mubr.f32.mxu0 0.0
    %526 = vmatmul.mubr.f32.gmra.mrb[0].mxu0 %v446
    %v527 = vpop.f32.mrb[0].mxu0
    %v528 = vadd.f32 %v432, %v527
    %v529 = vpop.f32.mrb[0].mxu0
    %530 = vmatprep.mubr.f32.mxu0 0.0
    %531 = vmatmul.mubr.f32.gmra.mrb[0].mxu0 %v449
    %v532 = vpop.f32.mrb[0].mxu0
    %v533 = vadd.f32 %v437, %v532
    %v534 = vpop.f32.mrb[0].mxu0
    %535 = vdwg.mxu0
    %536 = vst [vmem:[#allocation2] sm:$0xff] %v518
    %537 = vst [vmem:[#allocation2 + $0x8] sm:$0xff] %v523
    %538 = vst [vmem:[#allocation2 + $0x10] sm:$0xff] %v528
    %539 = vst [vmem:[#allocation2 + $0x18] sm:$0xff] %v533
    // Predicated region
    $region26: #{tpu_custom_call.1} parent=1 // pred_check
      _
    $region27: #{tpu_custom_call.1} parent=1 // pred_check_branch
      %541 = sbr.rel (0) target = $region29
    $region28: #{tpu_custom_call.1} parent=1 // pred_region
      %s543 = ssub.s32 512, 512
      %544 = vsyncadd [#allocation3], %s543
      %s545 = sshll.u32 [#allocation2], 4
      %s546 = int_to_ptr.vmem [resolvable:$true] %s545
      %551 = dma.vmem_to_hbm [thread:$0]  %s546, 512, %s6, [#allocation3], 128, 128, 8
    $region29: #{tpu_custom_call.1} parent=1 // pred_fallthru
      _
    // Predicated region
    $region30: #{tpu_custom_call.1} parent=1 // pred_check
      _
    $region31: #{tpu_custom_call.1} parent=1 // pred_check_branch
      %553 = sbr.rel (0) target = $region33
    $region32: #{tpu_custom_call.1} parent=1 // pred_region
      %554 = dma.done [#allocation3], 512
    $region33: #{tpu_custom_call.1} parent=1 // pred_fallthru
      _
    %555 = vsyncpa [#allocation3], 1

</llo_original>
